<compile_context>
chip_gen: v6e
topology: v6e:2x2x1
jax: 0.10.0
libtpu: 0.0.40
codegen_flags: <defaults>
</compile_context>

<pallas_src>
import jax
import jax.numpy as jnp
from jax.experimental import pallas as pl
from jax.experimental.pallas import tpu as pltpu


# ---------------------------------------------------------------------------
# Helpers
# ---------------------------------------------------------------------------

def _round_up(a: int, b: int) -> int:
    return -(-a // b) * b


def _sublane_multiple(dtype) -> int:
    # f32 -> 8, bf16/f16 -> 16, int8/fp8 -> 32 (sub-32-bit dtypes pack along sublanes).
    itemsize = jnp.dtype(dtype).itemsize
    return max(8, 32 // max(itemsize, 1))


def _device_kind() -> str:
    try:
        return jax.devices()[0].device_kind.lower()
    except Exception:
        return ""


def _gen_copy_params():
    """(target_tile_bytes, vmem_limit_bytes_or_None, prefer_two_blocks) per TPU generation."""
    kind = _device_kind()
    if "v7" in kind:
        # 2 bufs in + 2 bufs out * 6 MiB = 24 MiB, under the raised 40 MiB scoped limit.
        return 6 << 20, 40 << 20, True
    if "v6" in kind:
        # 4 * 4 MiB = 16 MiB fits the 32 MiB default scoped VMEM, no flag change needed.
        return 4 << 20, None, False
    # v5e (16 MiB default scoped VMEM) and unknown devices: conservative 2 MiB tiles.
    return 2 << 20, None, False


def _pick_tile_rows(rows_total: int, sub: int, rows_budget: int) -> int:
    """Largest sublane-aligned tile height <= budget, preferring exact divisors of rows_total."""
    budget = max(sub, (rows_budget // sub) * sub)
    tile = min(budget, max(sub, (rows_total // sub) * sub))
    if rows_total % tile == 0:
        return tile
    # Prefer an exact grid (no masked tail block) if a reasonable divisor exists.
    floor = max(sub, tile // 4)
    cand = tile - sub
    while cand >= floor:
        if rows_total % cand == 0:
            return cand
        cand -= sub
    return tile  # fall back: partial tail block, correctly masked by Pallas.


# ---------------------------------------------------------------------------
# Pallas copy kernel (materialized identity, VMEM-staged)
# ---------------------------------------------------------------------------

def _identity_copy_kernel(x_ref, o_ref):
    # Straight VMEM tile copy.
    o_ref[...] = x_ref[...]


def identity_copy_pallas(x, *, lane_width: int = 512, target_tile_bytes=None):
    """Materialized identity copy via a tiled Pallas kernel.

    Lane-dense inputs (last dim % 128 == 0, ndim >= 2) are tiled directly (no pad / slice).
    Ragged inputs are flattened and padded to a (rows, lane_width) slab; the pad and the
    trailing slice are only emitted when actually needed.
    """
    orig_shape = x.shape
    dtype = x.dtype
    n = x.size
    if n == 0:
        return x

    itemsize = jnp.dtype(dtype).itemsize
    sub = _sublane_multiple(dtype)

    tile_bytes, vmem_limit, prefer_two_blocks = _gen_copy_params()
    if target_tile_bytes is not None:
        tile_bytes = target_tile_bytes

    last = orig_shape[-1] if len(orig_shape) >= 1 else 1

    if len(orig_shape) >= 2 and last % 128 == 0:
        # ---- Direct path: no pad, no slice. Leading-dim collapse is free for contiguous arrays.
        cols = last
        rows_total = n // cols
        x2 = x.reshape(rows_total, cols)
        padded = False
    else:
        # ---- Padded path: flatten + pad to a lane-dense (rows_total, lane_width) slab.
        assert lane_width % 128 == 0, "lane_width must be a multiple of 128"
        cols = lane_width
        rows = pl.cdiv(n, cols)
        rows_total = _round_up(rows, sub)
        total = rows_total * cols
        flat = x.reshape(-1)
        padded = total != n
        if padded:
            flat = jnp.pad(flat, (0, total - n))
        x2 = flat.reshape(rows_total, cols)

    total_bytes = rows_total * cols * itemsize
    rows_budget = max(sub, tile_bytes // (cols * itemsize))

    if total_bytes <= tile_bytes:
        tile_rows = rows_total  # single block == full array dims (always a legal block shape)
    else:
        tile_rows = _pick_tile_rows(rows_total, sub, rows_budget)

    # v7x: prefer >= 2 parallel blocks on sizable copies so both TensorCores drive DMA.
    if (prefer_two_blocks and total_bytes >= (1 << 20) and rows_total >= 2 * sub
            and pl.cdiv(rows_total, tile_rows) == 1):
        tile_rows = _round_up(pl.cdiv(rows_total, 2), sub)

    num_blocks = pl.cdiv(rows_total, tile_rows)

    cp_kwargs = dict(dimension_semantics=("parallel",))
    if vmem_limit is not None:
        cp_kwargs["vmem_limit_bytes"] = vmem_limit

    out2 = pl.pallas_call(
        _identity_copy_kernel,
        out_shape=jax.ShapeDtypeStruct((rows_total, cols), dtype),
        grid_spec=pl.GridSpec(
            grid=(num_blocks,),
            in_specs=[pl.BlockSpec((tile_rows, cols), lambda i: (i, 0))],
            out_specs=pl.BlockSpec((tile_rows, cols), lambda i: (i, 0)),
        ),
        compiler_params=pltpu.CompilerParams(**cp_kwargs),
    )(x2)

    if padded:
        return out2.reshape(-1)[:n].reshape(orig_shape)
    return out2.reshape(orig_shape)


# ---------------------------------------------------------------------------
# Direct HBM->HBM DMA copy (no VMEM staging, no vector-slot work)
# ---------------------------------------------------------------------------

def identity_copy_dma(x, *, max_chunks: int = 4):
    """Materialized identity via chunked HBM->HBM DMA (memory_space=pl.ANY on both sides)."""
    if x.ndim == 0 or x.size == 0:
        return x

    rows = x.shape[0]
    nchunks = max(1, min(max_chunks, rows))
    chunk = -(-rows // nchunks)
    nchunks = -(-rows // chunk)
    bounds = []
    for c in range(nchunks):
        start = c * chunk
        bounds.append((start, min(chunk, rows - start)))

    def kernel(x_ref, o_ref, sem):
        # Issue all chunk DMAs (multiple in flight), then wait on all of them.
        for c, (start, size) in enumerate(bounds):
            pltpu.make_async_copy(x_ref.at[pl.ds(start, size)],
                                  o_ref.at[pl.ds(start, size)],
                                  sem.at[c]).start()
        for c, (start, size) in enumerate(bounds):
            pltpu.make_async_copy(x_ref.at[pl.ds(start, size)],
                                  o_ref.at[pl.ds(start, size)],
                                  sem.at[c]).wait()

    return pl.pallas_call(
        kernel,
        out_shape=jax.ShapeDtypeStruct(x.shape, x.dtype),
        in_specs=[pl.BlockSpec(memory_space=pl.ANY)],
        out_specs=pl.BlockSpec(memory_space=pl.ANY),
        scratch_shapes=[pltpu.SemaphoreType.DMA((nchunks,))],
    )(x)


# ---------------------------------------------------------------------------
# Module wrapper
# ---------------------------------------------------------------------------

def identity_projector_forward(x, placeholder_param=None):
    """IdentityProjector.forward: return the first input unchanged (no kernel launch)."""
    del placeholder_param  # mirrors nn.Parameter(torch.zeros(1)); unused in forward
    return x


class IdentityProjectorPallas:
    """JAX/Pallas mirror of IdentityProjector."""

    def __init__(self, input_dim: int, output_dim: int):
        # Matches nn.Parameter(torch.zeros(1)); does not affect the forward.
        self.placeholder_param = jnp.zeros((1,), dtype=jnp.float32)
        # TODO(synk): configure_optimizers (AdamW setup) is training-loop glue, not ported.

    def __call__(self, *args):
        return identity_projector_forward(args[0], self.placeholder_param)


if __name__ == "__main__":
    key = jax.random.PRNGKey(0)
    # Small shape consistent with a projector input: (batch, seq, hidden)
    x = jax.random.normal(key, (2, 8, 32), dtype=jnp.float32)

    model = IdentityProjectorPallas(input_dim=32, output_dim=32)

    # Forward path: zero-copy identity (fastest possible).
    y = jax.block_until_ready(model(x, "extra_arg_ignored"))
    assert y.shape == x.shape, (y.shape, x.shape)
    assert y.dtype == x.dtype, (y.dtype, x.dtype)
    assert bool(jnp.array_equal(y, x)), "identity output mismatch"

    # VMEM-staged copy kernel, padded path (last dim 32 is not lane-dense).
    y2 = jax.block_until_ready(identity_copy_pallas(x))
    assert y2.shape == x.shape and y2.dtype == x.dtype
    assert bool(jnp.array_equal(y2, x)), "pallas copy mismatch (f32 ragged)"

    # VMEM-staged copy kernel, direct path (last dim multiple of 128 -> no pad / slice emitted).
    xd = jax.random.normal(jax.random.PRNGKey(0), (2, 4, 128), dtype=jnp.float32)
    y3 = jax.block_until_ready(identity_copy_pallas(xd))
    assert y3.shape == xd.shape and y3.dtype == xd.dtype
    assert bool(jnp.array_equal(y3, xd)), "pallas copy mismatch (f32 lane-dense)"

    # Ragged / sub-32-bit case: tests padding + sublane alignment for bf16.
    xb = jax.random.normal(jax.random.PRNGKey(0), (2, 7, 33), dtype=jnp.bfloat16)
    y4 = jax.block_until_ready(identity_copy_pallas(xb))
    assert y4.shape == xb.shape and y4.dtype == xb.dtype
    assert bool(jnp.array_equal(y4, xb)), "pallas copy mismatch (bf16 ragged)"

    # Direct HBM->HBM DMA copy path (no VMEM staging).
    y5 = jax.block_until_ready(identity_copy_dma(x))
    assert y5.shape == x.shape and y5.dtype == x.dtype
    assert bool(jnp.array_equal(y5, x)), "pallas DMA copy mismatch"

    print("KERNEL_OK")
</pallas_src>

<mosaic_0001>
module attributes {stable_mosaic.version = 11 : i64} {
  func.func @_identity_copy_kernel(%arg0: i32, %arg1: memref<8x512xf32, #tpu.memory_space<vmem>>, %arg2: memref<8x512xf32, #tpu.memory_space<vmem>>) attributes {dimension_semantics = [#tpu.dimension_semantics<parallel>], iteration_bounds = array<i64: 1>, scalar_prefetch = 0 : i64, scratch_operands = 0 : i64, tpu.core_type = #tpu.core_type<tc>, window_params = [{transform_indices = @transform_0, window_bounds = array<i64: 8, 512>}, {transform_indices = @transform_1, window_bounds = array<i64: 8, 512>}]} {
    %c0 = arith.constant 0 : index
    %c0_0 = arith.constant 0 : index
    %0 = vector.load %arg1[%c0, %c0_0] : memref<8x512xf32, #tpu.memory_space<vmem>>, vector<8x512xf32>
    %c0_1 = arith.constant 0 : index
    %c0_2 = arith.constant 0 : index
    %1 = vector.load %arg2[%c0_1, %c0_2] : memref<8x512xf32, #tpu.memory_space<vmem>>, vector<8x512xf32>
    tpu.vector_store %arg2[%c0_1, %c0_2], %0 {strides = array<i32>} : memref<8x512xf32, #tpu.memory_space<vmem>>, vector<8x512xf32>,
    return
  }
  func.func @transform_0(%arg0: i32) -> (i32, i32) {
    %c0_i32 = arith.constant 0 : i32
    %c0_i32_0 = arith.constant 0 : i32
    return %arg0, %c0_i32 : i32, i32
  }
  func.func @transform_1(%arg0: i32) -> (i32, i32) {
    %c0_i32 = arith.constant 0 : i32
    %c0_i32_0 = arith.constant 0 : i32
    return %arg0, %c0_i32 : i32, i32
  }
}

</mosaic_0001>

<llo_original>
// kernel: tpu_custom_call.1
$region0: #{tpu_custom_call.1}
  #allocation0 [shape = 'u32[]', space=smem, size = 0x4, offset = 0x4, fixed_abs, tag = 'smem constant byte address 0x4 - core index']
  #allocation1 [shape = 'u32[144,128]{1,0:T(1,128)}', space=vmem, size = 0x12000, scoped, tag = 'internal scratch']
  %s0 = inlined_call_operand.hbm [shape: f32[8,512], index: 0, kind: input, shape index: {}]
  %s1 = inlined_call_operand.hbm [shape: f32[8,512], index: 1, kind: output, shape index: {}]
  %s2 = sld [smem:[#allocation0]]
  $region18: #{tpu_custom_call.1} parent=0
    _
  %s4 = ssub.s32 1, %s2
  %s5 = scalar_select 0, %s4, %s2
  $region1: #{tpu_custom_call.1} parent=0
    #allocation2 [shape = 'u8[16384]{0}', space=vmem, size = 0x4000, scoped, tag = 'input window, operand 0, single buffered']
    #allocation3 [shape = 's32[1]{0}', space=sflag, size = 0x4, scoped, tag = 'scoped memory for tpu_custom_call.1']
    #allocation4 [shape = 's32[1]{0}', space=sflag, size = 0x4, scoped, tag = 'scoped memory for tpu_custom_call.1']
    #allocation5 [shape = 'u8[16384]{0}', space=vmem, size = 0x4000, scoped, tag = 'output window, operand 0, single buffered']
    %6 = vsyncpa [#allocation3], 0
    %7 = vsyncpa [#allocation4], 0
    // Predicated region
    $region2: #{tpu_custom_call.1} parent=1 // pred_check
      _
    $region3: #{tpu_custom_call.1} parent=1 // pred_check_branch
      %9 = sbr.rel (0) target = $region5
    $region4: #{tpu_custom_call.1} parent=1 // pred_region
      %s11 = ssub.s32 512, 512
      %12 = vsyncadd [#allocation3], %s11
      %s14 = sshll.u32 [#allocation2], 4
      %s15 = int_to_ptr.vmem [resolvable:$true] %s14
      %17 = dma.hbm_to_vmem [thread:$0]  %s0, 512, %s15, [#allocation3]
    $region5: #{tpu_custom_call.1} parent=1 // pred_fallthru
      _
    // Predicated region
    $region6: #{tpu_custom_call.1} parent=1 // pred_check
      _
    $region7: #{tpu_custom_call.1} parent=1 // pred_check_branch
      %19 = sbr.rel (0) target = $region9
    $region8: #{tpu_custom_call.1} parent=1 // pred_region
      %20 = dma.done [#allocation3], 512
    $region9: #{tpu_custom_call.1} parent=1 // pred_fallthru
      _
    %v21 = vld [vmem:[#allocation2] sm:$0xff]
    %v22 = vld [vmem:[#allocation2 + $0x8] sm:$0xff]
    %v23 = vld [vmem:[#allocation2 + $0x10] sm:$0xff]
    %v24 = vld [vmem:[#allocation2 + $0x18] sm:$0xff]
    %25 = vst [vmem:[#allocation5] sm:$0xff] %v21
    %26 = vst [vmem:[#allocation5 + $0x8] sm:$0xff] %v22
    %27 = vst [vmem:[#allocation5 + $0x10] sm:$0xff] %v23
    %28 = vst [vmem:[#allocation5 + $0x18] sm:$0xff] %v24
    // Predicated region
    $region10: #{tpu_custom_call.1} parent=1 // pred_check
      _
    $region11: #{tpu_custom_call.1} parent=1 // pred_check_branch
      %30 = sbr.rel (0) target = $region13
    $region12: #{tpu_custom_call.1} parent=1 // pred_region
      %s32 = ssub.s32 512, 512
      %33 = vsyncadd [#allocation4], %s32
      %s35 = sshll.u32 [#allocation5], 4
      %s36 = int_to_ptr.vmem [resolvable:$true] %s35
      %38 = dma.vmem_to_hbm [thread:$0]  %s36, 512, %s1, [#allocation4]
    $region13: #{tpu_custom_call.1} parent=1 // pred_fallthru
      _
    // Predicated region
    $region14: #{tpu_custom_call.1} parent=1 // pred_check
      _
    $region15: #{tpu_custom_call.1} parent=1 // pred_check_branch
      %40 = sbr.rel (0) target = $region17
    $region16: #{tpu_custom_call.1} parent=1 // pred_region
      %41 = dma.done [#allocation4], 512
    $region17: #{tpu_custom_call.1} parent=1 // pred_fallthru
      _
    %42 = vsyncpa [#allocation3], 1
    %43 = vsyncpa [#allocation4], 1

</llo_original>
